<compile_context>
chip_gen: v6e
topology: v6e:2x2x1
jax: 0.10.0
libtpu: 0.0.40
codegen_flags: <defaults>
</compile_context>

<pallas_src>
import functools

import jax
import jax.numpy as jnp
from jax.experimental import pallas as pl
from jax.experimental.pallas import tpu as pltpu


def _round_up(x, m):
    return (x + m - 1) // m * m


def _ffn_kernel(x_ref, w12_ref, w3_ref, b12_ref, b3_ref, o_ref, *, hidden, approx):
    # x_ref  : (TM, dim)          tile of tokens (compute dtype)
    # w12_ref: (dim, 2*hidden)    fused gate|up projection (compute dtype)
    # w3_ref : (hidden, dim)      down projection (compute dtype)
    # b12_ref: (1, 2*hidden) f32, b3_ref: (1, dim) f32
    x = x_ref[...]

    # Fused gate/up projection: one larger MXU matmul, f32 accumulate.
    h12 = jnp.dot(x, w12_ref[...], preferred_element_type=jnp.float32) + b12_ref[...]
    h1 = h12[:, :hidden]          # gate pre-activation
    h2 = h12[:, hidden:]          # up projection

    # SiLU epilogue in f32 (v5e VPU/EUP have no bf16 path). The reciprocal goes to
    # the EUP slot when approx=True (bf16 fast path), keeping VALU slots free.
    gate = h1 * pl.reciprocal(1.0 + jnp.exp(-h1), approx=approx)
    h = (gate * h2).astype(w3_ref.dtype)

    out = jnp.dot(h, w3_ref[...], preferred_element_type=jnp.float32) + b3_ref[...]
    o_ref[...] = out.astype(o_ref.dtype)


def feedforward_pallas(x, w1, b1, w2, b2, w3, b3, *, tm=256, compute_dtype=None):
    """SwiGLU FFN forward.

    x: (B, S, dim). w1/w2: (dim, hidden). w3: (hidden, dim). b1/b2: (hidden,), b3: (dim,).
    compute_dtype: dtype of the matmul operands (e.g. jnp.bfloat16 for the MXU-native
    path). Accumulation, biases and the SiLU epilogue stay in f32; output keeps x.dtype.
    """
    B, S, dim = x.shape
    hidden = w1.shape[1]
    out_dtype = x.dtype
    if compute_dtype is None:
        compute_dtype = x.dtype
    approx = jnp.dtype(compute_dtype) == jnp.dtype(jnp.bfloat16)

    M = B * S
    # Row tile: as large as requested, shrunk to the problem and kept sublane-aligned.
    tm = _round_up(max(8, min(tm, M)), 8)
    M_pad = _round_up(M, tm)

    x2d = x.reshape(M, dim)
    if M_pad != M:
        x2d = jnp.pad(x2d, ((0, M_pad - M), (0, 0)))
    x2d = x2d.astype(compute_dtype)

    # Fuse gate/up weights -> a single (dim, 2*hidden) matmul per tile.
    w12 = jnp.concatenate([w1, w2], axis=1).astype(compute_dtype)
    b12 = jnp.concatenate([b1, b2]).reshape(1, 2 * hidden).astype(jnp.float32)
    w3c = w3.astype(compute_dtype)
    b3r = b3.reshape(1, dim).astype(jnp.float32)

    kernel = functools.partial(_ffn_kernel, hidden=hidden, approx=approx)

    flops = 6 * M_pad * dim * hidden  # 2*M*d*2h (gate|up) + 2*M*h*d (down)
    bytes_accessed = (
        x2d.size * x2d.dtype.itemsize
        + w12.size * w12.dtype.itemsize
        + w3c.size * w3c.dtype.itemsize
        + b12.size * 4
        + b3r.size * 4
        + M_pad * dim * out_dtype.itemsize
    )

    # TODO(synk): for real LLM sizes (e.g. dim=4096, hidden=11008) add a grid axis over
    # hidden (N-tile for w12, K-tile + f32 scratch accumulator + pl.when init/finalize
    # for w3) so the weights fit v7x's 64 MiB VMEM; not needed at these shapes.
    out2d = pl.pallas_call(
        kernel,
        out_shape=jax.ShapeDtypeStruct((M_pad, dim), out_dtype),
        grid_spec=pltpu.PrefetchScalarGridSpec(
            num_scalar_prefetch=0,
            grid=(M_pad // tm,),
            in_specs=[
                pl.BlockSpec((tm, dim), lambda i: (i, 0)),           # x tile
                pl.BlockSpec((dim, 2 * hidden), lambda i: (0, 0)),   # w1|w2 fused
                pl.BlockSpec((hidden, dim), lambda i: (0, 0)),       # w3
                pl.BlockSpec((1, 2 * hidden), lambda i: (0, 0)),     # b1|b2 fused
                pl.BlockSpec((1, dim), lambda i: (0, 0)),            # b3
            ],
            out_specs=pl.BlockSpec((tm, dim), lambda i: (i, 0)),
        ),
        compiler_params=pltpu.CompilerParams(
            dimension_semantics=("parallel",),
        ),
        cost_estimate=pl.CostEstimate(
            flops=flops,
            transcendentals=M_pad * hidden,
            bytes_accessed=bytes_accessed,
        ),
    )(x2d, w12, w3c, b12, b3r)

    return out2d[:M].reshape(B, S, dim)


def feedforward_reference(x, w1, b1, w2, b2, w3, b3):
    h1 = jnp.einsum("bsd,dh->bsh", x, w1) + b1
    h2 = jnp.einsum("bsd,dh->bsh", x, w2) + b2
    gate = h1 * jax.nn.sigmoid(h1)
    return jnp.einsum("bsh,hd->bsd", gate * h2, w3) + b3


if __name__ == "__main__":
    # Module config (mirrors FeedForward.__init__):
    #   dim=128, hidden_dim=192, multiple_of=128, use_bias=True
    #   -> hidden = 128 * ceil((2*192/3)/128) = 128
    dim = 128
    hidden_dim_arg = 192
    multiple_of = 128
    _h = int(2 * hidden_dim_arg / 3)
    hidden = multiple_of * ((_h + multiple_of - 1) // multiple_of)

    batch, seq = 2, 8

    key = jax.random.PRNGKey(0)
    kx, k1, k2, k3, kb1, kb2, kb3 = jax.random.split(key, 7)

    x = jax.random.normal(kx, (batch, seq, dim), dtype=jnp.float32)

    # nn.Linear weights are (out, in); store transposed (in, out) for the kernel.
    std = 0.02
    w1 = (std * jax.random.normal(k1, (hidden, dim), dtype=jnp.float32)).T
    w2 = (std * jax.random.normal(k2, (hidden, dim), dtype=jnp.float32)).T
    w3 = (std * jax.random.normal(k3, (dim, hidden), dtype=jnp.float32)).T
    b1 = 0.01 * jax.random.normal(kb1, (hidden,), dtype=jnp.float32)
    b2 = 0.01 * jax.random.normal(kb2, (hidden,), dtype=jnp.float32)
    b3 = 0.01 * jax.random.normal(kb3, (dim,), dtype=jnp.float32)

    ref = feedforward_reference(x, w1, b1, w2, b2, w3, b3)

    # f32 path (exact semantics of the original module).
    out_f32 = feedforward_pallas(x, w1, b1, w2, b2, w3, b3)
    out_f32 = jax.block_until_ready(out_f32)
    assert out_f32.shape == (batch, seq, dim)
    assert jnp.allclose(out_f32, ref, atol=2e-5, rtol=1e-4), "f32 mismatch vs reference"

    # bf16 matmul path (MXU-native operands, f32 accumulate + f32 epilogue).
    out_bf16 = feedforward_pallas(x, w1, b1, w2, b2, w3, b3, compute_dtype=jnp.bfloat16)
    out_bf16 = jax.block_until_ready(out_bf16)
    assert out_bf16.shape == (batch, seq, dim)
    assert jnp.allclose(out_bf16, ref, atol=5e-3, rtol=5e-2), "bf16 mismatch vs reference"

    print("KERNEL_OK")
</pallas_src>

<mosaic_0001>
module attributes {stable_mosaic.version = 11 : i64} {
  func.func @_ffn_kernel(%arg0: i32, %arg1: memref<16x128xf32, #tpu.memory_space<vmem>>, %arg2: memref<128x256xf32, #tpu.memory_space<vmem>>, %arg3: memref<128x128xf32, #tpu.memory_space<vmem>>, %arg4: memref<1x256xf32, #tpu.memory_space<vmem>>, %arg5: memref<1x128xf32, #tpu.memory_space<vmem>>, %arg6: memref<16x128xf32, #tpu.memory_space<vmem>>) attributes {dimension_semantics = [#tpu.dimension_semantics<parallel>], iteration_bounds = array<i64: 1>, scalar_prefetch = 0 : i64, scratch_operands = 0 : i64, tpu.core_type = #tpu.core_type<tc>, window_params = [{transform_indices = @transform_0, window_bounds = array<i64: 16, 128>}, {pipeline_mode = #tpu.pipeline_mode<synchronous>, transform_indices = @transform_1, window_bounds = array<i64: 128, 256>}, {pipeline_mode = #tpu.pipeline_mode<synchronous>, transform_indices = @transform_2, window_bounds = array<i64: 128, 128>}, {pipeline_mode = #tpu.pipeline_mode<synchronous>, transform_indices = @transform_3, window_bounds = array<i64: 1, 256>}, {pipeline_mode = #tpu.pipeline_mode<synchronous>, transform_indices = @transform_4, window_bounds = array<i64: 1, 128>}, {transform_indices = @transform_5, window_bounds = array<i64: 16, 128>}]} {
    %c0 = arith.constant 0 : index
    %c0_0 = arith.constant 0 : index
    %0 = vector.load %arg1[%c0, %c0_0] : memref<16x128xf32, #tpu.memory_space<vmem>>, vector<16x128xf32>
    %c0_1 = arith.constant 0 : index
    %c0_2 = arith.constant 0 : index
    %1 = vector.load %arg2[%c0_1, %c0_2] : memref<128x256xf32, #tpu.memory_space<vmem>>, vector<128x256xf32>
    %cst = arith.constant dense<0.000000e+00> : vector<16x256xf32>
    %2 = tpu.matmul %0, %1, %cst {dimension_numbers = #tpu.dot_dimension_numbers<[1], [0], [0], [1], [0, 0, 1, 1], [], []>} : vector<16x128xf32>, vector<128x256xf32>, vector<16x256xf32> -> vector<16x256xf32>
    %c0_3 = arith.constant 0 : index
    %c0_4 = arith.constant 0 : index
    %3 = vector.load %arg4[%c0_3, %c0_4] : memref<1x256xf32, #tpu.memory_space<vmem>>, vector<1x256xf32>
    %4 = vector.broadcast %3 : vector<1x256xf32> to vector<16x256xf32>
    %5 = arith.addf %2, %4 : vector<16x256xf32>
    %6 = vector.extract_strided_slice %5 {offsets = [0, 0], sizes = [16, 128], strides = [1, 1]} : vector<16x256xf32> to vector<16x128xf32>
    %7 = vector.extract_strided_slice %5 {offsets = [0, 128], sizes = [16, 128], strides = [1, 1]} : vector<16x256xf32> to vector<16x128xf32>
    %cst_5 = arith.constant 0.000000e+00 : f32
    %8 = vector.broadcast %cst_5 : f32 to vector<16x128xf32>
    %9 = arith.subf %8, %6 : vector<16x128xf32>
    %10 = math.exp %9 : vector<16x128xf32>
    %cst_6 = arith.constant 1.000000e+00 : f32
    %11 = vector.broadcast %cst_6 : f32 to vector<16x128xf32>
    %12 = arith.addf %11, %10 : vector<16x128xf32>
    %13 = tpu.reciprocal %12 : vector<16x128xf32> -> vector<16x128xf32>
    %14 = arith.mulf %6, %13 : vector<16x128xf32>
    %15 = arith.mulf %14, %7 : vector<16x128xf32>
    %c0_7 = arith.constant 0 : index
    %c0_8 = arith.constant 0 : index
    %16 = vector.load %arg3[%c0_7, %c0_8] : memref<128x128xf32, #tpu.memory_space<vmem>>, vector<128x128xf32>
    %cst_9 = arith.constant dense<0.000000e+00> : vector<16x128xf32>
    %17 = tpu.matmul %15, %16, %cst_9 {dimension_numbers = #tpu.dot_dimension_numbers<[1], [0], [0], [1], [0, 0, 1, 1], [], []>} : vector<16x128xf32>, vector<128x128xf32>, vector<16x128xf32> -> vector<16x128xf32>
    %c0_10 = arith.constant 0 : index
    %c0_11 = arith.constant 0 : index
    %18 = vector.load %arg5[%c0_10, %c0_11] : memref<1x128xf32, #tpu.memory_space<vmem>>, vector<1x128xf32>
    %19 = vector.broadcast %18 : vector<1x128xf32> to vector<16x128xf32>
    %20 = arith.addf %17, %19 : vector<16x128xf32>
    %c0_12 = arith.constant 0 : index
    %c0_13 = arith.constant 0 : index
    %21 = vector.load %arg6[%c0_12, %c0_13] : memref<16x128xf32, #tpu.memory_space<vmem>>, vector<16x128xf32>
    tpu.vector_store %arg6[%c0_12, %c0_13], %20 {strides = array<i32>} : memref<16x128xf32, #tpu.memory_space<vmem>>, vector<16x128xf32>,
    return
  }
  func.func @transform_0(%arg0: i32) -> (i32, i32) {
    %c0_i32 = arith.constant 0 : i32
    %c0_i32_0 = arith.constant 0 : i32
    return %arg0, %c0_i32 : i32, i32
  }
  func.func @transform_1(%arg0: i32) -> (i32, i32) {
    %c0_i32 = arith.constant 0 : i32
    %c0_i32_0 = arith.constant 0 : i32
    %c0_i32_1 = arith.constant 0 : i32
    return %c0_i32, %c0_i32_0 : i32, i32
  }
  func.func @transform_2(%arg0: i32) -> (i32, i32) {
    %c0_i32 = arith.constant 0 : i32
    %c0_i32_0 = arith.constant 0 : i32
    %c0_i32_1 = arith.constant 0 : i32
    return %c0_i32, %c0_i32_0 : i32, i32
  }
  func.func @transform_3(%arg0: i32) -> (i32, i32) {
    %c0_i32 = arith.constant 0 : i32
    %c0_i32_0 = arith.constant 0 : i32
    %c0_i32_1 = arith.constant 0 : i32
    return %c0_i32, %c0_i32_0 : i32, i32
  }
  func.func @transform_4(%arg0: i32) -> (i32, i32) {
    %c0_i32 = arith.constant 0 : i32
    %c0_i32_0 = arith.constant 0 : i32
    %c0_i32_1 = arith.constant 0 : i32
    return %c0_i32, %c0_i32_0 : i32, i32
  }
  func.func @transform_5(%arg0: i32) -> (i32, i32) {
    %c0_i32 = arith.constant 0 : i32
    %c0_i32_0 = arith.constant 0 : i32
    return %arg0, %c0_i32 : i32, i32
  }
}

</mosaic_0001>

<llo_original>
// kernel: tpu_custom_call.1
$region0: #{tpu_custom_call.1}
  #allocation0 [shape = 'u32[]', space=smem, size = 0x4, offset = 0x4, fixed_abs, tag = 'smem constant byte address 0x4 - core index']
  #allocation1 [shape = 'u32[144,128]{1,0:T(1,128)}', space=vmem, size = 0x12000, scoped, tag = 'internal scratch']
  %s0 = inlined_call_operand.hbm [shape: f32[16,128], index: 0, kind: input, shape index: {}]
  %s1 = inlined_call_operand.hbm [shape: f32[128,256], index: 1, kind: input, shape index: {}]
  %s2 = inlined_call_operand.hbm [shape: f32[128,128], index: 2, kind: input, shape index: {}]
  %s3 = inlined_call_operand.vmem [shape: f32[1,256], index: 3, kind: input, shape index: {}]
  %s4 = inlined_call_operand.vmem [shape: f32[1,128], index: 4, kind: input, shape index: {}]
  %s5 = inlined_call_operand.hbm [shape: f32[16,128], index: 5, kind: output, shape index: {}]
  %s6 = sld [smem:[#allocation0]]
  $region42: #{tpu_custom_call.1} parent=0
    _
  %s8 = ssub.s32 1, %s6
  %s9 = scalar_select 0, %s8, %s6
  $region1: #{tpu_custom_call.1} parent=0
    #allocation2 [shape = 'u8[8192]{0}', space=vmem, size = 0x2000, scoped, tag = 'input window, operand 0, single buffered']
    #allocation3 [shape = 's32[1]{0}', space=sflag, size = 0x4, scoped, tag = 'scoped memory for tpu_custom_call.1']
    #allocation4 [shape = 's32[1]{0}', space=sflag, size = 0x4, scoped, tag = 'scoped memory for tpu_custom_call.1']
    #allocation5 [shape = 'u8[131072]{0}', space=vmem, size = 0x20000, scoped, tag = 'input window, operand 1, single buffered']
    #allocation6 [shape = 's32[1]{0}', space=sflag, size = 0x4, scoped, tag = 'scoped memory for tpu_custom_call.1']
    #allocation7 [shape = 'u8[65536]{0}', space=vmem, size = 0x10000, scoped, tag = 'input window, operand 2, single buffered']
    #allocation8 [shape = 'u8[8192]{0}', space=vmem, size = 0x2000, scoped, tag = 'output window, operand 0, single buffered']
    %10 = vsyncpa [#allocation3], 0
    %11 = vsyncpa [#allocation6], 0
    %12 = vsyncpa [#allocation4], 0
    // Predicated region
    $region2: #{tpu_custom_call.1} parent=1 // pred_check
      _
    $region3: #{tpu_custom_call.1} parent=1 // pred_check_branch
      %14 = sbr.rel (0) target = $region5
    $region4: #{tpu_custom_call.1} parent=1 // pred_region
      %s16 = ssub.s32 256, 256
      %17 = vsyncadd [#allocation3], %s16
      %s18 = sshll.u32 [#allocation2], 4
      %s19 = int_to_ptr.vmem [resolvable:$true] %s18
      %24 = dma.hbm_to_vmem [thread:$0]  %s0, 256, %s19, [#allocation3], 128, 128, 8
    $region5: #{tpu_custom_call.1} parent=1 // pred_fallthru
      _
    // Predicated region
    $region6: #{tpu_custom_call.1} parent=1 // pred_check
      _
    $region7: #{tpu_custom_call.1} parent=1 // pred_check_branch
      %26 = sbr.rel (0) target = $region9
    $region8: #{tpu_custom_call.1} parent=1 // pred_region
      %s28 = ssub.s32 4096, 4096
      %29 = vsyncadd [#allocation6], %s28
      %s30 = sshll.u32 [#allocation5], 4
      %s31 = int_to_ptr.vmem [resolvable:$true] %s30
      %36 = dma.hbm_to_vmem [thread:$0]  %s1, 4096, %s31, [#allocation6], 256, 256, 16
    $region9: #{tpu_custom_call.1} parent=1 // pred_fallthru
      _
    // Predicated region
    $region10: #{tpu_custom_call.1} parent=1 // pred_check
      _
    $region11: #{tpu_custom_call.1} parent=1 // pred_check_branch
      %38 = sbr.rel (0) target = $region13
    $region12: #{tpu_custom_call.1} parent=1 // pred_region
      %s40 = ssub.s32 2048, 2048
      %41 = vsyncadd [#allocation6], %s40
      %s42 = sshll.u32 [#allocation7], 4
      %s43 = int_to_ptr.vmem [resolvable:$true] %s42
      %48 = dma.hbm_to_vmem [thread:$0]  %s2, 2048, %s43, [#allocation6], 128, 128, 8
    $region13: #{tpu_custom_call.1} parent=1 // pred_fallthru
      _
    // Predicated region
    $region14: #{tpu_custom_call.1} parent=1 // pred_check
      _
    $region15: #{tpu_custom_call.1} parent=1 // pred_check_branch
      %50 = sbr.rel (0) target = $region17
    $region16: #{tpu_custom_call.1} parent=1 // pred_region
      _
    $region17: #{tpu_custom_call.1} parent=1 // pred_fallthru
      _
    // Predicated region
    $region18: #{tpu_custom_call.1} parent=1 // pred_check
      _
    $region19: #{tpu_custom_call.1} parent=1 // pred_check_branch
      %52 = sbr.rel (0) target = $region21
    $region20: #{tpu_custom_call.1} parent=1 // pred_region
      _
    $region21: #{tpu_custom_call.1} parent=1 // pred_fallthru
      _
    // Predicated region
    $region22: #{tpu_custom_call.1} parent=1 // pred_check
      _
    $region23: #{tpu_custom_call.1} parent=1 // pred_check_branch
      %54 = sbr.rel (0) target = $region25
    $region24: #{tpu_custom_call.1} parent=1 // pred_region
      %55 = dma.done [#allocation3], 256
    $region25: #{tpu_custom_call.1} parent=1 // pred_fallthru
      _
    // Predicated region
    $region26: #{tpu_custom_call.1} parent=1 // pred_check
      _
    $region27: #{tpu_custom_call.1} parent=1 // pred_check_branch
      %57 = sbr.rel (0) target = $region29
    $region28: #{tpu_custom_call.1} parent=1 // pred_region
      %58 = dma.done [#allocation6], 4096
    $region29: #{tpu_custom_call.1} parent=1 // pred_fallthru
      _
    // Predicated region
    $region30: #{tpu_custom_call.1} parent=1 // pred_check
      _
    $region31: #{tpu_custom_call.1} parent=1 // pred_check_branch
      %60 = sbr.rel (0) target = $region33
    $region32: #{tpu_custom_call.1} parent=1 // pred_region
      %61 = dma.done [#allocation6], 2048
    $region33: #{tpu_custom_call.1} parent=1 // pred_fallthru
      _
    %v62 = vld [vmem:[#allocation2] sm:$0xff]
    %v63 = vld [vmem:[#allocation2 + $0x8] sm:$0xff]
    %v64 = vld [vmem:[#allocation5] sm:$0xff]
    %v65 = vld [vmem:[#allocation5 + $0x8] sm:$0xff]
    %v66 = vld [vmem:[#allocation5 + $0x10] sm:$0xff]
    %v67 = vld [vmem:[#allocation5 + $0x18] sm:$0xff]
    %v68 = vld [vmem:[#allocation5 + $0x20] sm:$0xff]
    %v69 = vld [vmem:[#allocation5 + $0x28] sm:$0xff]
    %v70 = vld [vmem:[#allocation5 + $0x30] sm:$0xff]
    %v71 = vld [vmem:[#allocation5 + $0x38] sm:$0xff]
    %v72 = vld [vmem:[#allocation5 + $0x40] sm:$0xff]
    %v73 = vld [vmem:[#allocation5 + $0x48] sm:$0xff]
    %v74 = vld [vmem:[#allocation5 + $0x50] sm:$0xff]
    %v75 = vld [vmem:[#allocation5 + $0x58] sm:$0xff]
    %v76 = vld [vmem:[#allocation5 + $0x60] sm:$0xff]
    %v77 = vld [vmem:[#allocation5 + $0x68] sm:$0xff]
    %v78 = vld [vmem:[#allocation5 + $0x70] sm:$0xff]
    %v79 = vld [vmem:[#allocation5 + $0x78] sm:$0xff]
    %v80 = vld [vmem:[#allocation5 + $0x80] sm:$0xff]
    %v81 = vld [vmem:[#allocation5 + $0x88] sm:$0xff]
    %v82 = vld [vmem:[#allocation5 + $0x90] sm:$0xff]
    %v83 = vld [vmem:[#allocation5 + $0x98] sm:$0xff]
    %v84 = vld [vmem:[#allocation5 + $0xa0] sm:$0xff]
    %v85 = vld [vmem:[#allocation5 + $0xa8] sm:$0xff]
    %v86 = vld [vmem:[#allocation5 + $0xb0] sm:$0xff]
    %v87 = vld [vmem:[#allocation5 + $0xb8] sm:$0xff]
    %v88 = vld [vmem:[#allocation5 + $0xc0] sm:$0xff]
    %v89 = vld [vmem:[#allocation5 + $0xc8] sm:$0xff]
    %v90 = vld [vmem:[#allocation5 + $0xd0] sm:$0xff]
    %v91 = vld [vmem:[#allocation5 + $0xd8] sm:$0xff]
    %v92 = vld [vmem:[#allocation5 + $0xe0] sm:$0xff]
    %v93 = vld [vmem:[#allocation5 + $0xe8] sm:$0xff]
    %v94 = vld [vmem:[#allocation5 + $0xf0] sm:$0xff]
    %v95 = vld [vmem:[#allocation5 + $0xf8] sm:$0xff]
    %v96 = vld [vmem:[%s3] sm:$0x3]
    %v98 = vlaneseq
    %v99 = vshrl.u32 %v98, 7
    %v100 = vsub.s32 0, %v99
    %v101 = vrot.slane %v96, %v100
    %v102 = vlaneseq
    %v103 = vshrl.u32 %v102, 7
    %v104 = vsub.s32 1, %v103
    %v105 = vrot.slane %v96, %v104
    %108 = vmatprep.subr.mxu0 %v95
    %109 = vmatpush1.msra.mxu0 %v94
    %110 = vmatprep.subr.mxu0 %v93
    %111 = vmatpush1.msra.mxu0 %v92
    %112 = vmatprep.subr.mxu0 %v91
    %113 = vmatpush1.msra.mxu0 %v90
    %114 = vmatprep.subr.mxu0 %v89
    %115 = vmatpush1.msra.mxu0 %v88
    %116 = vmatprep.subr.mxu0 %v87
    %117 = vmatpush1.msra.mxu0 %v86
    %118 = vmatprep.subr.mxu0 %v85
    %119 = vmatpush1.msra.mxu0 %v84
    %120 = vmatprep.subr.mxu0 %v83
    %121 = vmatpush1.msra.mxu0 %v82
    %122 = vmatprep.subr.mxu0 %v81
    %123 = vmatpush1.msra.mxu0 %v80
    %124 = vmatprep.subr.mxu0 %v79
    %125 = vmatpush1.msra.mxu0 %v78
    %126 = vmatprep.subr.mxu0 %v77
    %127 = vmatpush1.msra.mxu0 %v76
    %128 = vmatprep.subr.mxu0 %v75
    %129 = vmatpush1.msra.mxu0 %v74
    %130 = vmatprep.subr.mxu0 %v73
    %131 = vmatpush1.msra.mxu0 %v72
    %132 = vmatprep.subr.mxu0 %v71
    %133 = vmatpush1.msra.mxu0 %v70
    %134 = vmatprep.subr.mxu0 %v69
    %135 = vmatpush1.msra.mxu0 %v68
    %136 = vmatprep.subr.mxu0 %v67
    %137 = vmatpush1.msra.mxu0 %v66
    %138 = vmatprep.subr.mxu0 %v65
    %139 = vmatpush1.msra.mxu0 %v64
    %140 = vmatprep.subr.mxu0 0.0
    %141 = vmatpush2.msra.mxu0 0.0
    %142 = vmatprep.subr.mxu0 0.0
    %143 = vmatpush2.msra.mxu0 0.0
    %144 = vmatprep.subr.mxu0 0.0
    %145 = vmatpush2.msra.mxu0 0.0
    %146 = vmatprep.subr.mxu0 0.0
    %147 = vmatpush2.msra.mxu0 0.0
    %148 = vmatprep.subr.mxu0 0.0
    %149 = vmatpush2.msra.mxu0 0.0
    %150 = vmatprep.subr.mxu0 0.0
    %151 = vmatpush2.msra.mxu0 0.0
    %152 = vmatprep.subr.mxu0 0.0
    %153 = vmatpush2.msra.mxu0 0.0
    %154 = vmatprep.subr.mxu0 0.0
    %155 = vmatpush2.msra.mxu0 0.0
    %156 = vmatprep.subr.mxu0 0.0
    %157 = vmatpush2.msra.mxu0 0.0
    %158 = vmatprep.subr.mxu0 0.0
    %159 = vmatpush2.msra.mxu0 0.0
    %160 = vmatprep.subr.mxu0 0.0
    %161 = vmatpush2.msra.mxu0 0.0
    %162 = vmatprep.subr.mxu0 0.0
    %163 = vmatpush2.msra.mxu0 0.0
    %164 = vmatprep.subr.mxu0 0.0
    %165 = vmatpush2.msra.mxu0 0.0
    %166 = vmatprep.subr.mxu0 0.0
    %167 = vmatpush2.msra.mxu0 0.0
    %168 = vmatprep.subr.mxu0 0.0
    %169 = vmatpush2.msra.mxu0 0.0
    %170 = vmatprep.subr.mxu0 0.0
    %171 = vmatpush2.msra.mxu0 0.0
    %172 = vmatprep.mubr.f32.mxu0 0.0
    %173 = vmatmul.mubr.f32.gmra.mxu0 %v62
    %v174 = vpop.f32.mrf.mxu0
    %v175 = vadd.f32 %v101, %v174
    %v176 = vpop.f32.mrf.mxu0
    %v177 = vadd.f32 %v105, %v176
    %178 = vmatprep.mubr.f32.mxu0 0.0
    %179 = vmatmul.mubr.f32.gmra.mxu0 %v63
    %v180 = vpop.f32.mrf.mxu0
    %v181 = vadd.f32 %v101, %v180
    %v182 = vpop.f32.mrf.mxu0
    %v183 = vadd.f32 %v105, %v182
    %184 = vdwg.mxu0
    %v185 = vsub.f32 0.0, %v175
    %v186 = vsub.f32 0.0, %v181
    %v187 = vmul.f32 %v185, 1.442695
    %v188 = vpow.pop %v187
    %v189 = vmul.f32 %v186, 1.442695
    %v190 = vpow.pop %v189
    %v191 = vadd.f32 %v188, 1.0
    %v192 = vadd.f32 %v190, 1.0
    %v193 = vrcp.pop %v191
    %v194 = vrcp.pop %v192
    %v195 = vmul.f32 %v175, %v193
    %v196 = vmul.f32 %v181, %v194
    %v197 = vmul.f32 %v195, %v177
    %v198 = vmul.f32 %v196, %v183
    %v199 = vld [vmem:[#allocation7] sm:$0xff]
    %v200 = vld [vmem:[#allocation7 + $0x8] sm:$0xff]
    %v201 = vld [vmem:[#allocation7 + $0x10] sm:$0xff]
    %v202 = vld [vmem:[#allocation7 + $0x18] sm:$0xff]
    %v203 = vld [vmem:[#allocation7 + $0x20] sm:$0xff]
    %v204 = vld [vmem:[#allocation7 + $0x28] sm:$0xff]
    %v205 = vld [vmem:[#allocation7 + $0x30] sm:$0xff]
    %v206 = vld [vmem:[#allocation7 + $0x38] sm:$0xff]
    %v207 = vld [vmem:[#allocation7 + $0x40] sm:$0xff]
    %v208 = vld [vmem:[#allocation7 + $0x48] sm:$0xff]
    %v209 = vld [vmem:[#allocation7 + $0x50] sm:$0xff]
    %v210 = vld [vmem:[#allocation7 + $0x58] sm:$0xff]
    %v211 = vld [vmem:[#allocation7 + $0x60] sm:$0xff]
    %v212 = vld [vmem:[#allocation7 + $0x68] sm:$0xff]
    %v213 = vld [vmem:[#allocation7 + $0x70] sm:$0xff]
    %v214 = vld [vmem:[#allocation7 + $0x78] sm:$0xff]
    %v215 = vld [vmem:[%s4] sm:$0x1]
    %v217 = vlaneseq
    %v218 = vshrl.u32 %v217, 7
    %v219 = vsub.s32 0, %v218
    %v220 = vrot.slane %v215, %v219
    %222 = vmatprep.subr.mxu0 0.0
    %223 = vmatpush1.msra.mxu0 %v214
    %224 = vmatprep.subr.mxu0 0.0
    %225 = vmatpush1.msra.mxu0 %v213
    %226 = vmatprep.subr.mxu0 0.0
    %227 = vmatpush1.msra.mxu0 %v212
    %228 = vmatprep.subr.mxu0 0.0
    %229 = vmatpush1.msra.mxu0 %v211
    %230 = vmatprep.subr.mxu0 0.0
    %231 = vmatpush1.msra.mxu0 %v210
    %232 = vmatprep.subr.mxu0 0.0
    %233 = vmatpush1.msra.mxu0 %v209
    %234 = vmatprep.subr.mxu0 0.0
    %235 = vmatpush1.msra.mxu0 %v208
    %236 = vmatprep.subr.mxu0 0.0
    %237 = vmatpush1.msra.mxu0 %v207
    %238 = vmatprep.subr.mxu0 0.0
    %239 = vmatpush1.msra.mxu0 %v206
    %240 = vmatprep.subr.mxu0 0.0
    %241 = vmatpush1.msra.mxu0 %v205
    %242 = vmatprep.subr.mxu0 0.0
    %243 = vmatpush1.msra.mxu0 %v204
    %244 = vmatprep.subr.mxu0 0.0
    %245 = vmatpush1.msra.mxu0 %v203
    %246 = vmatprep.subr.mxu0 0.0
    %247 = vmatpush1.msra.mxu0 %v202
    %248 = vmatprep.subr.mxu0 0.0
    %249 = vmatpush1.msra.mxu0 %v201
    %250 = vmatprep.subr.mxu0 0.0
    %251 = vmatpush1.msra.mxu0 %v200
    %252 = vmatprep.subr.mxu0 0.0
    %253 = vmatpush1.msra.mxu0 %v199
    %254 = vmatprep.subr.mxu0 0.0
    %255 = vmatpush2.msra.mxu0 0.0
    %256 = vmatprep.subr.mxu0 0.0
    %257 = vmatpush2.msra.mxu0 0.0
    %258 = vmatprep.subr.mxu0 0.0
    %259 = vmatpush2.msra.mxu0 0.0
    %260 = vmatprep.subr.mxu0 0.0
    %261 = vmatpush2.msra.mxu0 0.0
    %262 = vmatprep.subr.mxu0 0.0
    %263 = vmatpush2.msra.mxu0 0.0
    %264 = vmatprep.subr.mxu0 0.0
    %265 = vmatpush2.msra.mxu0 0.0
    %266 = vmatprep.subr.mxu0 0.0
    %267 = vmatpush2.msra.mxu0 0.0
    %268 = vmatprep.subr.mxu0 0.0
    %269 = vmatpush2.msra.mxu0 0.0
    %270 = vmatprep.subr.mxu0 0.0
    %271 = vmatpush2.msra.mxu0 0.0
    %272 = vmatprep.subr.mxu0 0.0
    %273 = vmatpush2.msra.mxu0 0.0
    %274 = vmatprep.subr.mxu0 0.0
    %275 = vmatpush2.msra.mxu0 0.0
    %276 = vmatprep.subr.mxu0 0.0
    %277 = vmatpush2.msra.mxu0 0.0
    %278 = vmatprep.subr.mxu0 0.0
    %279 = vmatpush2.msra.mxu0 0.0
    %280 = vmatprep.subr.mxu0 0.0
    %281 = vmatpush2.msra.mxu0 0.0
    %282 = vmatprep.subr.mxu0 0.0
    %283 = vmatpush2.msra.mxu0 0.0
    %284 = vmatprep.subr.mxu0 0.0
    %285 = vmatpush2.msra.mxu0 0.0
    %286 = vmatprep.mubr.f32.mxu0 0.0
    %287 = vmatmul.mubr.f32.gmra.mxu0 %v197
    %v288 = vpop.f32.mrf.mxu0
    %v289 = vadd.f32 %v220, %v288
    %v290 = vpop.f32.mrf.mxu0
    %291 = vmatprep.mubr.f32.mxu0 0.0
    %292 = vmatmul.mubr.f32.gmra.mxu0 %v198
    %v293 = vpop.f32.mrf.mxu0
    %v294 = vadd.f32 %v220, %v293
    %v295 = vpop.f32.mrf.mxu0
    %296 = vdwg.mxu0
    %297 = vst [vmem:[#allocation8] sm:$0xff] %v289
    %298 = vst [vmem:[#allocation8 + $0x8] sm:$0xff] %v294
    // Predicated region
    $region34: #{tpu_custom_call.1} parent=1 // pred_check
      _
    $region35: #{tpu_custom_call.1} parent=1 // pred_check_branch
      %300 = sbr.rel (0) target = $region37
    $region36: #{tpu_custom_call.1} parent=1 // pred_region
      %s302 = ssub.s32 256, 256
      %303 = vsyncadd [#allocation4], %s302
      %s304 = sshll.u32 [#allocation8], 4
      %s305 = int_to_ptr.vmem [resolvable:$true] %s304
      %310 = dma.vmem_to_hbm [thread:$0]  %s305, 256, %s5, [#allocation4], 128, 128, 8
    $region37: #{tpu_custom_call.1} parent=1 // pred_fallthru
      _
    // Predicated region
    $region38: #{tpu_custom_call.1} parent=1 // pred_check
      _
    $region39: #{tpu_custom_call.1} parent=1 // pred_check_branch
      %312 = sbr.rel (0) target = $region41
    $region40: #{tpu_custom_call.1} parent=1 // pred_region
      %313 = dma.done [#allocation4], 256
    $region41: #{tpu_custom_call.1} parent=1 // pred_fallthru
      _
    %314 = vsyncpa [#allocation3], 1
    %315 = vsyncpa [#allocation6], 1
    %316 = vsyncpa [#allocation4], 1

</llo_original>
